<compile_context>
chip_gen: v7x
topology: tpu7x:2x2x1
jax: 0.10.0
libtpu: 0.0.40
codegen_flags: <defaults>
</compile_context>

<pallas_src>
import jax
import jax.numpy as jnp
from jax.experimental import pallas as pl
from jax.experimental.pallas import tpu as pltpu


def _gating_kernel(x_ref,
                   w0_ref, b0_ref,
                   w1_ref, b1_ref,
                   w2_ref, b2_ref,
                   w3_ref, b3_ref,
                   scale_ref,
                   out_ref):
    # --- hidden MLP layers: bf16 MXU matmul, f32 accumulate, f32 bias + ReLU ---
    # astype is a no-op if the caller already streams bf16 activations.
    h = x_ref[...].astype(jnp.bfloat16)
    h = jnp.maximum(
        jnp.dot(h, w0_ref[...], preferred_element_type=jnp.float32) + b0_ref[...], 0.0)
    h = jnp.maximum(
        jnp.dot(h.astype(jnp.bfloat16), w1_ref[...],
                preferred_element_type=jnp.float32) + b1_ref[...], 0.0)
    h = jnp.maximum(
        jnp.dot(h.astype(jnp.bfloat16), w2_ref[...],
                preferred_element_type=jnp.float32) + b2_ref[...], 0.0)

    # --- output projection; 1/temperature already folded into w3/b3 wrapper-side ---
    logits = jnp.dot(h.astype(jnp.bfloat16), w3_ref[...],
                     preferred_element_type=jnp.float32) + b3_ref[...]

    # --- numerically stable softmax fused with the logit_scale multiply ---
    m = jnp.max(logits, axis=-1, keepdims=True)
    e = jnp.exp(logits - m)
    s = jnp.sum(e, axis=-1, keepdims=True)
    # e / s * scale  ==  e * (scale * (1/s)); reciprocal goes to the EUP slot.
    out_ref[...] = (e * (scale_ref[0] * pl.reciprocal(s, approx=True))
                    ).astype(out_ref.dtype)


def _round_up(v, m):
    return ((v + m - 1) // m) * m


def gating_network_forward(x, params, *, temperature=10.0, block_b=1024):
    """Full GatingNetwork forward in one batch-tiled Pallas kernel.

    x: [B, in_features] float32 or bfloat16
    params: dict with w0..w3 ([in,out] f32), b0..b3 ([1,out] f32), logit_scale ([1] f32)
    """
    B, in_f = x.shape
    out_f = params["w3"].shape[1]

    # Sublane multiple: 16 for bf16 activations (sublane packing), 8 for f32.
    sub = 16 if x.dtype == jnp.bfloat16 else 8

    if B <= block_b:
        # Single grid step: one tile covering the whole (padded) batch.
        tm = _round_up(max(B, sub), sub)
        num_blocks = 1
    else:
        # Balanced equal blocks (matters on v7x where the grid axis is sharded
        # across 2 TensorCores); tm stays a sublane multiple.
        num_blocks = pl.cdiv(B, block_b)
        tm = _round_up(pl.cdiv(B, num_blocks), sub)
        num_blocks = pl.cdiv(B, tm)

    b_pad = num_blocks * tm
    if b_pad != B:
        x = jnp.pad(x, ((0, b_pad - B), (0, 0)))

    # Wrapper-side (trace-time) prep: bf16 weights for the MXU, temperature folded
    # into the last layer so the kernel never divides the logits.
    w0 = params["w0"].astype(jnp.bfloat16)
    w1 = params["w1"].astype(jnp.bfloat16)
    w2 = params["w2"].astype(jnp.bfloat16)
    w3 = (params["w3"] / temperature).astype(jnp.bfloat16)
    b3 = params["b3"] / temperature

    def resident(arr):
        # Full-array block with a constant index_map -> stays VMEM-resident
        # (single DMA) across all batch-grid steps.
        return pl.BlockSpec(arr.shape, lambda i: (0,) * arr.ndim)

    # VMEM budget: resident weights/biases ~22 KB; streamed x tile tm*in_f*dtype
    # and out tile tm*out_f*4, each double-buffered.  Even tm=2048 f32 is well
    # under v7x's 32 MiB scoped default, so no vmem_limit_bytes override needed.
    out = pl.pallas_call(
        _gating_kernel,
        out_shape=jax.ShapeDtypeStruct((b_pad, out_f), jnp.float32),
        grid=(num_blocks,),
        in_specs=[
            pl.BlockSpec((tm, in_f), lambda i: (i, 0)),          # x tile (pipelined)
            resident(w0), resident(params["b0"]),
            resident(w1), resident(params["b1"]),
            resident(w2), resident(params["b2"]),
            resident(w3), resident(b3),
            pl.BlockSpec(memory_space=pltpu.MemorySpace.SMEM),    # logit_scale scalar
        ],
        out_specs=pl.BlockSpec((tm, out_f), lambda i: (i, 0)),
        compiler_params=pltpu.CompilerParams(
            dimension_semantics=("parallel",),                    # 2 TCs on v7x
        ),
    )(
        x,
        w0, params["b0"],
        w1, params["b1"],
        w2, params["b2"],
        w3, b3,
        params["logit_scale"],
    )
    return out[:B] if b_pad != B else out


def _module_reference_f32(x, params, *, temperature=10.0):
    """Pure-f32 JAX reference mirroring the PyTorch module semantics exactly."""
    h = x.astype(jnp.float32)
    for i in range(3):
        h = jnp.maximum(h @ params[f"w{i}"] + params[f"b{i}"], 0.0)
    logits = h @ params["w3"] + params["b3"]
    probs = jax.nn.softmax(logits / temperature, axis=1)
    return probs * params["logit_scale"][0]


def _kernel_matched_reference(x, params, *, temperature=10.0):
    """JAX reference mirroring the kernel math (bf16 matmul operands, folded T)."""
    h = x
    for i in range(3):
        w = params[f"w{i}"].astype(jnp.bfloat16)
        h = jnp.maximum(
            jnp.dot(h.astype(jnp.bfloat16), w,
                    preferred_element_type=jnp.float32) + params[f"b{i}"], 0.0)
    w3 = (params["w3"] / temperature).astype(jnp.bfloat16)
    b3 = params["b3"] / temperature
    logits = jnp.dot(h.astype(jnp.bfloat16), w3,
                     preferred_element_type=jnp.float32) + b3
    probs = jax.nn.softmax(logits, axis=1)
    return probs * params["logit_scale"][0]


def make_params(key, in_features, hidden_dim, out_features, logit_scale=1.0):
    """Deterministic synthetic parameters (shapes match the nn.Module)."""
    keys = jax.random.split(key, 8)
    dims = [(in_features, hidden_dim),
            (hidden_dim, hidden_dim),
            (hidden_dim, hidden_dim),
            (hidden_dim, out_features)]
    params = {}
    for i, (din, dout) in enumerate(dims):
        scale = 1.0 / jnp.sqrt(din)
        params[f"w{i}"] = jax.random.uniform(
            keys[2 * i], (din, dout), jnp.float32, -scale, scale)
        params[f"b{i}"] = jax.random.uniform(
            keys[2 * i + 1], (1, dout), jnp.float32, -scale, scale)
    params["logit_scale"] = jnp.ones((1,), jnp.float32) * logit_scale
    return params


if __name__ == "__main__":
    # Small shapes consistent with the module; B=200 now runs as a SINGLE grid
    # step with a (208, 32) tile (plus the padding/slice path).
    B, IN_FEATURES, HIDDEN_DIM, OUT_FEATURES = 200, 32, 64, 8
    TEMPERATURE = 10.0

    key = jax.random.PRNGKey(0)
    k_x, k_p, k_x2 = jax.random.split(key, 3)
    x = jax.random.normal(k_x, (B, IN_FEATURES), jnp.float32)
    params = make_params(k_p, IN_FEATURES, HIDDEN_DIM, OUT_FEATURES, logit_scale=1.0)

    # TODO(synk): dropout (dropout_prob > 0, training mode) not implemented; module default is 0.0.
    out = gating_network_forward(x, params, temperature=TEMPERATURE)
    out = jax.block_until_ready(out)
    assert out.shape == (B, OUT_FEATURES)

    # Tight check vs a reference that mirrors the kernel math (bf16 operands,
    # folded temperature); slack covers the approx reciprocal (~few ULP).
    ref_matched = _kernel_matched_reference(x, params, temperature=TEMPERATURE)
    assert jnp.allclose(out, ref_matched, atol=1e-3, rtol=1e-3), \
        "mismatch vs kernel-matched JAX reference"

    # Semantic check vs the pure-f32 module reference (slack covers bf16 matmuls).
    ref_f32 = _module_reference_f32(x, params, temperature=TEMPERATURE)
    assert jnp.allclose(out, ref_f32, atol=5e-3, rtol=5e-2), \
        "mismatch vs f32 module reference"

    # Exercise the multi-block balanced-tiling path with bf16 activations
    # (bf16 x streamed directly, no wrapper-side cast added by the wrapper).
    B2 = 2600
    x2 = jax.random.normal(k_x2, (B2, IN_FEATURES), jnp.float32).astype(jnp.bfloat16)
    out2 = jax.block_until_ready(
        gating_network_forward(x2, params, temperature=TEMPERATURE, block_b=1024))
    assert out2.shape == (B2, OUT_FEATURES)
    ref2 = _kernel_matched_reference(x2, params, temperature=TEMPERATURE)
    assert jnp.allclose(out2, ref2, atol=1e-3, rtol=1e-3), \
        "mismatch vs kernel-matched JAX reference (bf16 multi-block path)"

    print("KERNEL_OK")
</pallas_src>

<mosaic_0001>
module attributes {stable_mosaic.version = 11 : i64} {
  func.func @_gating_kernel(%arg0: i32, %arg1: memref<200x32xf32, #tpu.memory_space<vmem>>, %arg2: memref<32x64xbf16, #tpu.memory_space<vmem>>, %arg3: memref<1x64xf32, #tpu.memory_space<vmem>>, %arg4: memref<64x64xbf16, #tpu.memory_space<vmem>>, %arg5: memref<1x64xf32, #tpu.memory_space<vmem>>, %arg6: memref<64x64xbf16, #tpu.memory_space<vmem>>, %arg7: memref<1x64xf32, #tpu.memory_space<vmem>>, %arg8: memref<64x8xbf16, #tpu.memory_space<vmem>>, %arg9: memref<1x8xf32, #tpu.memory_space<vmem>>, %arg10: memref<1xf32, #tpu.memory_space<smem>>, %arg11: memref<200x8xf32, #tpu.memory_space<vmem>>) attributes {dimension_semantics = [#tpu.dimension_semantics<parallel>], iteration_bounds = array<i64: 1>, scalar_prefetch = 0 : i64, scratch_operands = 0 : i64, tpu.core_type = #tpu.core_type<tc>, window_params = [{transform_indices = @transform_0, window_bounds = array<i64: 200, 32>}, {pipeline_mode = #tpu.pipeline_mode<synchronous>, transform_indices = @transform_1, window_bounds = array<i64: 32, 64>}, {pipeline_mode = #tpu.pipeline_mode<synchronous>, transform_indices = @transform_2, window_bounds = array<i64: 1, 64>}, {pipeline_mode = #tpu.pipeline_mode<synchronous>, transform_indices = @transform_3, window_bounds = array<i64: 64, 64>}, {pipeline_mode = #tpu.pipeline_mode<synchronous>, transform_indices = @transform_4, window_bounds = array<i64: 1, 64>}, {pipeline_mode = #tpu.pipeline_mode<synchronous>, transform_indices = @transform_5, window_bounds = array<i64: 64, 64>}, {pipeline_mode = #tpu.pipeline_mode<synchronous>, transform_indices = @transform_6, window_bounds = array<i64: 1, 64>}, {pipeline_mode = #tpu.pipeline_mode<synchronous>, transform_indices = @transform_7, window_bounds = array<i64: 64, 8>}, {pipeline_mode = #tpu.pipeline_mode<synchronous>, transform_indices = @transform_8, window_bounds = array<i64: 1, 8>}, {transform_indices = @transform_9, window_bounds = array<i64: 1>}, {transform_indices = @transform_10, window_bounds = array<i64: 200, 8>}]} {
    %c0 = arith.constant 0 : index
    %c0_0 = arith.constant 0 : index
    %0 = vector.load %arg1[%c0, %c0_0] : memref<200x32xf32, #tpu.memory_space<vmem>>, vector<200x32xf32>
    %1 = arith.truncf %0 : vector<200x32xf32> to vector<200x32xbf16>
    %c0_1 = arith.constant 0 : index
    %c0_2 = arith.constant 0 : index
    %2 = vector.load %arg2[%c0_1, %c0_2] : memref<32x64xbf16, #tpu.memory_space<vmem>>, vector<32x64xbf16>
    %cst = arith.constant dense<0.000000e+00> : vector<200x64xf32>
    %3 = tpu.matmul %1, %2, %cst {dimension_numbers = #tpu.dot_dimension_numbers<[1], [0], [0], [1], [0, 0, 1, 1], [], []>} : vector<200x32xbf16>, vector<32x64xbf16>, vector<200x64xf32> -> vector<200x64xf32>
    %c0_3 = arith.constant 0 : index
    %c0_4 = arith.constant 0 : index
    %4 = vector.load %arg3[%c0_3, %c0_4] : memref<1x64xf32, #tpu.memory_space<vmem>>, vector<1x64xf32>
    %5 = vector.broadcast %4 : vector<1x64xf32> to vector<200x64xf32>
    %6 = arith.addf %3, %5 : vector<200x64xf32>
    %cst_5 = arith.constant 0.000000e+00 : f32
    %7 = vector.broadcast %cst_5 : f32 to vector<200x64xf32>
    %8 = arith.maximumf %6, %7 : vector<200x64xf32>
    %9 = arith.truncf %8 : vector<200x64xf32> to vector<200x64xbf16>
    %c0_6 = arith.constant 0 : index
    %c0_7 = arith.constant 0 : index
    %10 = vector.load %arg4[%c0_6, %c0_7] : memref<64x64xbf16, #tpu.memory_space<vmem>>, vector<64x64xbf16>
    %cst_8 = arith.constant dense<0.000000e+00> : vector<200x64xf32>
    %11 = tpu.matmul %9, %10, %cst_8 {dimension_numbers = #tpu.dot_dimension_numbers<[1], [0], [0], [1], [0, 0, 1, 1], [], []>} : vector<200x64xbf16>, vector<64x64xbf16>, vector<200x64xf32> -> vector<200x64xf32>
    %c0_9 = arith.constant 0 : index
    %c0_10 = arith.constant 0 : index
    %12 = vector.load %arg5[%c0_9, %c0_10] : memref<1x64xf32, #tpu.memory_space<vmem>>, vector<1x64xf32>
    %13 = vector.broadcast %12 : vector<1x64xf32> to vector<200x64xf32>
    %14 = arith.addf %11, %13 : vector<200x64xf32>
    %cst_11 = arith.constant 0.000000e+00 : f32
    %15 = vector.broadcast %cst_11 : f32 to vector<200x64xf32>
    %16 = arith.maximumf %14, %15 : vector<200x64xf32>
    %17 = arith.truncf %16 : vector<200x64xf32> to vector<200x64xbf16>
    %c0_12 = arith.constant 0 : index
    %c0_13 = arith.constant 0 : index
    %18 = vector.load %arg6[%c0_12, %c0_13] : memref<64x64xbf16, #tpu.memory_space<vmem>>, vector<64x64xbf16>
    %cst_14 = arith.constant dense<0.000000e+00> : vector<200x64xf32>
    %19 = tpu.matmul %17, %18, %cst_14 {dimension_numbers = #tpu.dot_dimension_numbers<[1], [0], [0], [1], [0, 0, 1, 1], [], []>} : vector<200x64xbf16>, vector<64x64xbf16>, vector<200x64xf32> -> vector<200x64xf32>
    %c0_15 = arith.constant 0 : index
    %c0_16 = arith.constant 0 : index
    %20 = vector.load %arg7[%c0_15, %c0_16] : memref<1x64xf32, #tpu.memory_space<vmem>>, vector<1x64xf32>
    %21 = vector.broadcast %20 : vector<1x64xf32> to vector<200x64xf32>
    %22 = arith.addf %19, %21 : vector<200x64xf32>
    %cst_17 = arith.constant 0.000000e+00 : f32
    %23 = vector.broadcast %cst_17 : f32 to vector<200x64xf32>
    %24 = arith.maximumf %22, %23 : vector<200x64xf32>
    %25 = arith.truncf %24 : vector<200x64xf32> to vector<200x64xbf16>
    %c0_18 = arith.constant 0 : index
    %c0_19 = arith.constant 0 : index
    %26 = vector.load %arg8[%c0_18, %c0_19] : memref<64x8xbf16, #tpu.memory_space<vmem>>, vector<64x8xbf16>
    %cst_20 = arith.constant dense<0.000000e+00> : vector<200x8xf32>
    %27 = tpu.matmul %25, %26, %cst_20 {dimension_numbers = #tpu.dot_dimension_numbers<[1], [0], [0], [1], [0, 0, 1, 1], [], []>} : vector<200x64xbf16>, vector<64x8xbf16>, vector<200x8xf32> -> vector<200x8xf32>
    %c0_21 = arith.constant 0 : index
    %c0_22 = arith.constant 0 : index
    %28 = vector.load %arg9[%c0_21, %c0_22] : memref<1x8xf32, #tpu.memory_space<vmem>>, vector<1x8xf32>
    %29 = vector.broadcast %28 : vector<1x8xf32> to vector<200x8xf32>
    %30 = arith.addf %27, %29 : vector<200x8xf32>
    %cst_23 = arith.constant dense<0xFF800000> : vector<200xf32>
    %31 = vector.multi_reduction <maximumf>, %30, %cst_23 [1] : vector<200x8xf32> to vector<200xf32>
    %32 = vector.shape_cast %31 : vector<200xf32> to vector<200x1xf32>
    %33 = vector.broadcast %32 : vector<200x1xf32> to vector<200x8xf32>
    %34 = arith.subf %30, %33 : vector<200x8xf32>
    %35 = math.exp %34 : vector<200x8xf32>
    %cst_24 = arith.constant dense<0.000000e+00> : vector<200xf32>
    %36 = vector.multi_reduction <add>, %35, %cst_24 [1] : vector<200x8xf32> to vector<200xf32>
    %37 = vector.shape_cast %36 : vector<200xf32> to vector<200x1xf32>
    %c0_25 = arith.constant 0 : index
    %38 = memref.load %arg10[%c0_25] : memref<1xf32, #tpu.memory_space<smem>>
    %39 = tpu.reciprocal %37 {approx = true} : vector<200x1xf32> -> vector<200x1xf32>
    %40 = vector.broadcast %38 : f32 to vector<200x1xf32>
    %41 = arith.mulf %40, %39 : vector<200x1xf32>
    %42 = vector.broadcast %41 : vector<200x1xf32> to vector<200x8xf32>
    %43 = arith.mulf %35, %42 : vector<200x8xf32>
    %c0_26 = arith.constant 0 : index
    %c0_27 = arith.constant 0 : index
    %44 = vector.load %arg11[%c0_26, %c0_27] : memref<200x8xf32, #tpu.memory_space<vmem>>, vector<200x8xf32>
    tpu.vector_store %arg11[%c0_26, %c0_27], %43 {strides = array<i32>} : memref<200x8xf32, #tpu.memory_space<vmem>>, vector<200x8xf32>,
    return
  }
  func.func @transform_0(%arg0: i32) -> (i32, i32) {
    %c0_i32 = arith.constant 0 : i32
    %c0_i32_0 = arith.constant 0 : i32
    return %arg0, %c0_i32 : i32, i32
  }
  func.func @transform_1(%arg0: i32) -> (i32, i32) {
    %c0_i32 = arith.constant 0 : i32
    %c0_i32_0 = arith.constant 0 : i32
    %c0_i32_1 = arith.constant 0 : i32
    return %c0_i32, %c0_i32_0 : i32, i32
  }
  func.func @transform_2(%arg0: i32) -> (i32, i32) {
    %c0_i32 = arith.constant 0 : i32
    %c0_i32_0 = arith.constant 0 : i32
    %c0_i32_1 = arith.constant 0 : i32
    return %c0_i32, %c0_i32_0 : i32, i32
  }
  func.func @transform_3(%arg0: i32) -> (i32, i32) {
    %c0_i32 = arith.constant 0 : i32
    %c0_i32_0 = arith.constant 0 : i32
    %c0_i32_1 = arith.constant 0 : i32
    return %c0_i32, %c0_i32_0 : i32, i32
  }
  func.func @transform_4(%arg0: i32) -> (i32, i32) {
    %c0_i32 = arith.constant 0 : i32
    %c0_i32_0 = arith.constant 0 : i32
    %c0_i32_1 = arith.constant 0 : i32
    return %c0_i32, %c0_i32_0 : i32, i32
  }
  func.func @transform_5(%arg0: i32) -> (i32, i32) {
    %c0_i32 = arith.constant 0 : i32
    %c0_i32_0 = arith.constant 0 : i32
    %c0_i32_1 = arith.constant 0 : i32
    return %c0_i32, %c0_i32_0 : i32, i32
  }
  func.func @transform_6(%arg0: i32) -> (i32, i32) {
    %c0_i32 = arith.constant 0 : i32
    %c0_i32_0 = arith.constant 0 : i32
    %c0_i32_1 = arith.constant 0 : i32
    return %c0_i32, %c0_i32_0 : i32, i32
  }
  func.func @transform_7(%arg0: i32) -> (i32, i32) {
    %c0_i32 = arith.constant 0 : i32
    %c0_i32_0 = arith.constant 0 : i32
    %c0_i32_1 = arith.constant 0 : i32
    return %c0_i32, %c0_i32_0 : i32, i32
  }
  func.func @transform_8(%arg0: i32) -> (i32, i32) {
    %c0_i32 = arith.constant 0 : i32
    %c0_i32_0 = arith.constant 0 : i32
    %c0_i32_1 = arith.constant 0 : i32
    return %c0_i32, %c0_i32_0 : i32, i32
  }
  func.func @transform_9(%arg0: i32) -> i32 {
    %c0_i32 = arith.constant 0 : i32
    %c0_i32_0 = arith.constant 0 : i32
    return %c0_i32 : i32
  }
  func.func @transform_10(%arg0: i32) -> (i32, i32) {
    %c0_i32 = arith.constant 0 : i32
    %c0_i32_0 = arith.constant 0 : i32
    return %arg0, %c0_i32 : i32, i32
  }
}

</mosaic_0001>

<llo_original>
// kernel: tpu_custom_call.1
$region0: #{tpu_custom_call.1}
  #allocation0 [shape = 'u32[]', space=smem, size = 0x4, offset = 0x4, fixed_abs, tag = 'smem constant byte address 0x4 - core index']
  #allocation1 [shape = 'u32[144,128]{1,0:T(1,128)}', space=vmem, size = 0x12000, scoped, tag = 'internal scratch']
  #allocation2 [shape = 'f32[1]{0:T(128)S(6)}', space=smem, size = 0x200, scoped, tag = 'scoped memory for tpu_custom_call.1']
  %s0 = inlined_call_operand.vmem [shape: f32[200,32], index: 0, kind: input, shape index: {}]
  %s1 = inlined_call_operand.vmem [shape: bf16[32,64], index: 1, kind: input, shape index: {}]
  %s2 = inlined_call_operand.vmem [shape: f32[1,64], index: 2, kind: input, shape index: {}]
  %s3 = inlined_call_operand.vmem [shape: bf16[64,64], index: 3, kind: input, shape index: {}]
  %s4 = inlined_call_operand.vmem [shape: f32[1,64], index: 4, kind: input, shape index: {}]
  %s5 = inlined_call_operand.vmem [shape: bf16[64,64], index: 5, kind: input, shape index: {}]
  %s6 = inlined_call_operand.vmem [shape: f32[1,64], index: 6, kind: input, shape index: {}]
  %s7 = inlined_call_operand.vmem [shape: bf16[64,8], index: 7, kind: input, shape index: {}]
  %s8 = inlined_call_operand.vmem [shape: f32[1,8], index: 8, kind: input, shape index: {}]
  %s9 = inlined_call_operand.<no memory space> [shape: f32[1], index: 9, kind: input, shape index: {}]
  %s10 = inlined_call_operand.vmem [shape: f32[200,8], index: 10, kind: output, shape index: {}]
  %s11 = sld [smem:[#allocation0]]
  $region50: #{tpu_custom_call.1} parent=0
    _
  %s13 = ssub.s32 1, %s11
  %s14 = scalar_select 0, %s13, %s11
  %15 = sst [smem:[#allocation2]] %s9
  // Predicated region
  $region2: #{tpu_custom_call.1} parent=0 // pred_check
    _
  $region3: #{tpu_custom_call.1} parent=0 // pred_check_branch
    %17 = sbr.rel (0) target = $region5
  $region4: #{tpu_custom_call.1} parent=0 // pred_region
    _
  $region5: #{tpu_custom_call.1} parent=0 // pred_fallthru
    _
  // Predicated region
  $region6: #{tpu_custom_call.1} parent=0 // pred_check
    _
  $region7: #{tpu_custom_call.1} parent=0 // pred_check_branch
    %19 = sbr.rel (0) target = $region9
  $region8: #{tpu_custom_call.1} parent=0 // pred_region
    _
  $region9: #{tpu_custom_call.1} parent=0 // pred_fallthru
    _
  // Predicated region
  $region10: #{tpu_custom_call.1} parent=0 // pred_check
    _
  $region11: #{tpu_custom_call.1} parent=0 // pred_check_branch
    %21 = sbr.rel (0) target = $region13
  $region12: #{tpu_custom_call.1} parent=0 // pred_region
    _
  $region13: #{tpu_custom_call.1} parent=0 // pred_fallthru
    _
  // Predicated region
  $region14: #{tpu_custom_call.1} parent=0 // pred_check
    _
  $region15: #{tpu_custom_call.1} parent=0 // pred_check_branch
    %23 = sbr.rel (0) target = $region17
  $region16: #{tpu_custom_call.1} parent=0 // pred_region
    _
  $region17: #{tpu_custom_call.1} parent=0 // pred_fallthru
    _
  // Predicated region
  $region18: #{tpu_custom_call.1} parent=0 // pred_check
    _
  $region19: #{tpu_custom_call.1} parent=0 // pred_check_branch
    %25 = sbr.rel (0) target = $region21
  $region20: #{tpu_custom_call.1} parent=0 // pred_region
    _
  $region21: #{tpu_custom_call.1} parent=0 // pred_fallthru
    _
  // Predicated region
  $region22: #{tpu_custom_call.1} parent=0 // pred_check
    _
  $region23: #{tpu_custom_call.1} parent=0 // pred_check_branch
    %27 = sbr.rel (0) target = $region25
  $region24: #{tpu_custom_call.1} parent=0 // pred_region
    _
  $region25: #{tpu_custom_call.1} parent=0 // pred_fallthru
    _
  // Predicated region
  $region26: #{tpu_custom_call.1} parent=0 // pred_check
    _
  $region27: #{tpu_custom_call.1} parent=0 // pred_check_branch
    %29 = sbr.rel (0) target = $region29
  $region28: #{tpu_custom_call.1} parent=0 // pred_region
    _
  $region29: #{tpu_custom_call.1} parent=0 // pred_fallthru
    _
  // Predicated region
  $region30: #{tpu_custom_call.1} parent=0 // pred_check
    _
  $region31: #{tpu_custom_call.1} parent=0 // pred_check_branch
    %31 = sbr.rel (0) target = $region33
  $region32: #{tpu_custom_call.1} parent=0 // pred_region
    _
  $region33: #{tpu_custom_call.1} parent=0 // pred_fallthru
    _
  // Predicated region
  $region34: #{tpu_custom_call.1} parent=0 // pred_check
    _
  $region35: #{tpu_custom_call.1} parent=0 // pred_check_branch
    %33 = sbr.rel (0) target = $region37
  $region36: #{tpu_custom_call.1} parent=0 // pred_region
    _
  $region37: #{tpu_custom_call.1} parent=0 // pred_fallthru
    _
  // Predicated region
  $region38: #{tpu_custom_call.1} parent=0 // pred_check
    _
  $region39: #{tpu_custom_call.1} parent=0 // pred_check_branch
    %35 = sbr.rel (0) target = $region41
  $region40: #{tpu_custom_call.1} parent=0 // pred_region
    _
  $region41: #{tpu_custom_call.1} parent=0 // pred_fallthru
    _
  %v37 = vld [vmem:[%s0] sm:$0xff]
  %v38 = vld [vmem:[%s0 + $0x8] sm:$0xff]
  %v39 = vld [vmem:[%s0 + $0x10] sm:$0xff]
  %v40 = vld [vmem:[%s0 + $0x18] sm:$0xff]
  %v41 = vld [vmem:[%s0 + $0x20] sm:$0xff]
  %v42 = vld [vmem:[%s0 + $0x28] sm:$0xff]
  %v43 = vld [vmem:[%s0 + $0x30] sm:$0xff]
  %v44 = vld [vmem:[%s0 + $0x38] sm:$0xff]
  %v45 = vld [vmem:[%s0 + $0x40] sm:$0xff]
  %v46 = vld [vmem:[%s0 + $0x48] sm:$0xff]
  %v47 = vld [vmem:[%s0 + $0x50] sm:$0xff]
  %v48 = vld [vmem:[%s0 + $0x58] sm:$0xff]
  %v49 = vld [vmem:[%s0 + $0x60] sm:$0xff]
  %v50 = vld [vmem:[%s0 + $0x68] sm:$0xff]
  %v51 = vld [vmem:[%s0 + $0x70] sm:$0xff]
  %v52 = vld [vmem:[%s0 + $0x78] sm:$0xff]
  %v53 = vld [vmem:[%s0 + $0x80] sm:$0xff]
  %v54 = vld [vmem:[%s0 + $0x88] sm:$0xff]
  %v55 = vld [vmem:[%s0 + $0x90] sm:$0xff]
  %v56 = vld [vmem:[%s0 + $0x98] sm:$0xff]
  %v57 = vld [vmem:[%s0 + $0xa0] sm:$0xff]
  %v58 = vld [vmem:[%s0 + $0xa8] sm:$0xff]
  %v59 = vld [vmem:[%s0 + $0xb0] sm:$0xff]
  %v60 = vld [vmem:[%s0 + $0xb8] sm:$0xff]
  %v61 = vld [vmem:[%s0 + $0xc0] sm:$0xff]
  %v62 = vpack.c.bf16 %v38, %v37
  %v63 = vpack.c.bf16 %v40, %v39
  %v64 = vpack.c.bf16 %v42, %v41
  %v65 = vpack.c.bf16 %v44, %v43
  %v66 = vpack.c.bf16 %v46, %v45
  %v67 = vpack.c.bf16 %v48, %v47
  %v68 = vpack.c.bf16 %v50, %v49
  %v69 = vpack.c.bf16 %v52, %v51
  %v70 = vpack.c.bf16 %v54, %v53
  %v71 = vpack.c.bf16 %v56, %v55
  %v72 = vpack.c.bf16 %v58, %v57
  %v73 = vpack.c.bf16 %v60, %v59
  %v74 = vpack.c.bf16 %v61, %v61
  %v75 = vld [vmem:[%s1] sm:$0xf]
  %v76 = vld [vmem:[%s1 + $0x4] sm:$0xf]
  %v77 = vld [vmem:[%s1 + $0x8] sm:$0xf]
  %v78 = vld [vmem:[%s1 + $0xc] sm:$0xf]
  %v79 = vld [vmem:[%s2] sm:$0x1]
  %v81 = vlaneseq
  %v82 = vshrl.u32 %v81, 7
  %v83 = vsub.s32 0, %v82
  %v84 = vrot.slane %v79, %v83
  %v90 = vunpack.c.l.b16 %v75
  %v91 = vunpack.c.l.b16 %v76
  %v92 = vunpack.c.l.b16 %v77
  %v93 = vunpack.c.l.b16 %v78
  %v94 = vpack.c.b16 %v91, %v90
  %v95 = vpack.c.b16 %v93, %v92
  %vm98 = vcmask 261120
  %v100 = vsel %vm98, %v62, 0
  %v103 = vsel %vm98, %v63, 0
  %v106 = vsel %vm98, %v64, 0
  %v109 = vsel %vm98, %v65, 0
  %v112 = vsel %vm98, %v66, 0
  %v115 = vsel %vm98, %v67, 0
  %v118 = vsel %vm98, %v68, 0
  %v121 = vsel %vm98, %v69, 0
  %v124 = vsel %vm98, %v70, 0
  %v127 = vsel %vm98, %v71, 0
  %v130 = vsel %vm98, %v72, 0
  %v133 = vsel %vm98, %v73, 0
  %v136 = vsel %vm98, %v74, 0
  %138 = vmatprep.subr.bf16.mxu0 0
  %139 = vmatpush1.bf16.msra.mxu0 %v94
  %140 = vmatprep.subr.bf16.mxu0 0
  %141 = vmatpush1.bf16.msra.mxu0 %v95
  %142 = vmatprep.subr.bf16.mxu0 0
  %143 = vmatpush1.bf16.msra.mxu0 0
  %144 = vmatprep.subr.bf16.mxu0 0
  %145 = vmatpush1.bf16.msra.mxu0 0
  %146 = vmatprep.subr.bf16.mxu0 0
  %147 = vmatpush1.bf16.msra.mxu0 0
  %148 = vmatprep.subr.bf16.mxu0 0
  %149 = vmatpush1.bf16.msra.mxu0 0
  %150 = vmatprep.subr.bf16.mxu0 0
  %151 = vmatpush1.bf16.msra.mxu0 0
  %152 = vmatprep.subr.bf16.mxu0 0
  %153 = vmatpush1.bf16.msra.mxu0 0
  %154 = vmatprep.subr.bf16.mxu0 0
  %155 = vmatpush1.bf16.msra.mxu0 0
  %156 = vmatprep.subr.bf16.mxu0 0
  %157 = vmatpush1.bf16.msra.mxu0 0
  %158 = vmatprep.subr.bf16.mxu0 0
  %159 = vmatpush1.bf16.msra.mxu0 0
  %160 = vmatprep.subr.bf16.mxu0 0
  %161 = vmatpush1.bf16.msra.mxu0 0
  %162 = vmatprep.subr.bf16.mxu0 0
  %163 = vmatpush1.bf16.msra.mxu0 0
  %164 = vmatprep.subr.bf16.mxu0 0
  %165 = vmatpush1.bf16.msra.mxu0 0
  %166 = vmatprep.subr.bf16.mxu0 0
  %167 = vmatpush1.bf16.msra.mxu0 0
  %168 = vmatprep.subr.bf16.mxu0 0
  %169 = vmatpush1.bf16.msra.mxu0 0
  %170 = vmatprep.mubr.bf16.mxu0 0
  %171 = vmatmul.mubr.bf16.gmra.mrb[0].mxu0 %v100
  %v172 = vpop.f32.mrb[0].mxu0
  %v173 = vadd.f32 %v84, %v172
  %v174 = vpop.f32.mrb[0].mxu0
  %v175 = vpop.f32.mrb[0].mxu0
  %v176 = vadd.f32 %v84, %v175
  %v177 = vpop.f32.mrb[0].mxu0
  %178 = vmatprep.mubr.bf16.mxu0 0
  %179 = vmatmul.mubr.bf16.gmra.mrb[0].mxu0 %v103
  %v180 = vpop.f32.mrb[0].mxu0
  %v181 = vadd.f32 %v84, %v180
  %v182 = vpop.f32.mrb[0].mxu0
  %v183 = vpop.f32.mrb[0].mxu0
  %v184 = vadd.f32 %v84, %v183
  %v185 = vpop.f32.mrb[0].mxu0
  %186 = vmatprep.mubr.bf16.mxu0 0
  %187 = vmatmul.mubr.bf16.gmra.mrb[0].mxu0 %v106
  %v188 = vpop.f32.mrb[0].mxu0
  %v189 = vadd.f32 %v84, %v188
  %v190 = vpop.f32.mrb[0].mxu0
  %v191 = vpop.f32.mrb[0].mxu0
  %v192 = vadd.f32 %v84, %v191
  %v193 = vpop.f32.mrb[0].mxu0
  %194 = vmatprep.mubr.bf16.mxu0 0
  %195 = vmatmul.mubr.bf16.gmra.mrb[0].mxu0 %v109
  %v196 = vpop.f32.mrb[0].mxu0
  %v197 = vadd.f32 %v84, %v196
  %v198 = vpop.f32.mrb[0].mxu0
  %v199 = vpop.f32.mrb[0].mxu0
  %v200 = vadd.f32 %v84, %v199
  %v201 = vpop.f32.mrb[0].mxu0
  %202 = vmatprep.mubr.bf16.mxu0 0
  %203 = vmatmul.mubr.bf16.gmra.mrb[0].mxu0 %v112
  %v204 = vpop.f32.mrb[0].mxu0
  %v205 = vadd.f32 %v84, %v204
  %v206 = vpop.f32.mrb[0].mxu0
  %v207 = vpop.f32.mrb[0].mxu0
  %v208 = vadd.f32 %v84, %v207
  %v209 = vpop.f32.mrb[0].mxu0
  %210 = vmatprep.mubr.bf16.mxu0 0
  %211 = vmatmul.mubr.bf16.gmra.mrb[0].mxu0 %v115
  %v212 = vpop.f32.mrb[0].mxu0
  %v213 = vadd.f32 %v84, %v212
  %v214 = vpop.f32.mrb[0].mxu0
  %v215 = vpop.f32.mrb[0].mxu0
  %v216 = vadd.f32 %v84, %v215
  %v217 = vpop.f32.mrb[0].mxu0
  %218 = vmatprep.mubr.bf16.mxu0 0
  %219 = vmatmul.mubr.bf16.gmra.mrb[0].mxu0 %v118
  %v220 = vpop.f32.mrb[0].mxu0
  %v221 = vadd.f32 %v84, %v220
  %v222 = vpop.f32.mrb[0].mxu0
  %v223 = vpop.f32.mrb[0].mxu0
  %v224 = vadd.f32 %v84, %v223
  %v225 = vpop.f32.mrb[0].mxu0
  %226 = vmatprep.mubr.bf16.mxu0 0
  %227 = vmatmul.mubr.bf16.gmra.mrb[0].mxu0 %v121
  %v228 = vpop.f32.mrb[0].mxu0
  %v229 = vadd.f32 %v84, %v228
  %v230 = vpop.f32.mrb[0].mxu0
  %v231 = vpop.f32.mrb[0].mxu0
  %v232 = vadd.f32 %v84, %v231
  %v233 = vpop.f32.mrb[0].mxu0
  %234 = vmatprep.mubr.bf16.mxu0 0
  %235 = vmatmul.mubr.bf16.gmra.mrb[0].mxu0 %v124
  %v236 = vpop.f32.mrb[0].mxu0
  %v237 = vadd.f32 %v84, %v236
  %v238 = vpop.f32.mrb[0].mxu0
  %v239 = vpop.f32.mrb[0].mxu0
  %v240 = vadd.f32 %v84, %v239
  %v241 = vpop.f32.mrb[0].mxu0
  %242 = vmatprep.mubr.bf16.mxu0 0
  %243 = vmatmul.mubr.bf16.gmra.mrb[0].mxu0 %v127
  %v244 = vpop.f32.mrb[0].mxu0
  %v245 = vadd.f32 %v84, %v244
  %v246 = vpop.f32.mrb[0].mxu0
  %v247 = vpop.f32.mrb[0].mxu0
  %v248 = vadd.f32 %v84, %v247
  %v249 = vpop.f32.mrb[0].mxu0
  %250 = vmatprep.mubr.bf16.mxu0 0
  %251 = vmatmul.mubr.bf16.gmra.mrb[0].mxu0 %v130
  %v252 = vpop.f32.mrb[0].mxu0
  %v253 = vadd.f32 %v84, %v252
  %v254 = vpop.f32.mrb[0].mxu0
  %v255 = vpop.f32.mrb[0].mxu0
  %v256 = vadd.f32 %v84, %v255
  %v257 = vpop.f32.mrb[0].mxu0
  %258 = vmatprep.mubr.bf16.mxu0 0
  %259 = vmatmul.mubr.bf16.gmra.mrb[0].mxu0 %v133
  %v260 = vpop.f32.mrb[0].mxu0
  %v261 = vadd.f32 %v84, %v260
  %v262 = vpop.f32.mrb[0].mxu0
  %v263 = vpop.f32.mrb[0].mxu0
  %v264 = vadd.f32 %v84, %v263
  %v265 = vpop.f32.mrb[0].mxu0
  %266 = vmatprep.mubr.bf16.mxu0 0
  %267 = vmatmul.mubr.bf16.gmra.mrb[0].mxu0 %v136
  %v268 = vpop.f32.mrb[0].mxu0
  %v269 = vadd.f32 %v84, %v268
  %v270 = vpop.f32.mrb[0].mxu0
  %v271 = vpop.f32.mrb[0].mxu0
  %v272 = vpop.f32.mrb[0].mxu0
  %273 = vdwg.mxu0
  %v274 = vmax.f32 %v173, 0.0
  %v275 = vmax.f32 %v176, 0.0
  %v276 = vmax.f32 %v181, 0.0
  %v277 = vmax.f32 %v184, 0.0
  %v278 = vmax.f32 %v189, 0.0
  %v279 = vmax.f32 %v192, 0.0
  %v280 = vmax.f32 %v197, 0.0
  %v281 = vmax.f32 %v200, 0.0
  %v282 = vmax.f32 %v205, 0.0
  %v283 = vmax.f32 %v208, 0.0
  %v284 = vmax.f32 %v213, 0.0
  %v285 = vmax.f32 %v216, 0.0
  %v286 = vmax.f32 %v221, 0.0
  %v287 = vmax.f32 %v224, 0.0
  %v288 = vmax.f32 %v229, 0.0
  %v289 = vmax.f32 %v232, 0.0
  %v290 = vmax.f32 %v237, 0.0
  %v291 = vmax.f32 %v240, 0.0
  %v292 = vmax.f32 %v245, 0.0
  %v293 = vmax.f32 %v248, 0.0
  %v294 = vmax.f32 %v253, 0.0
  %v295 = vmax.f32 %v256, 0.0
  %v296 = vmax.f32 %v261, 0.0
  %v297 = vmax.f32 %v264, 0.0
  %v298 = vmax.f32 %v269, 0.0
  %v299 = vpack.c.bf16 %v275, %v274
  %v300 = vpack.c.bf16 %v277, %v276
  %v301 = vpack.c.bf16 %v279, %v278
  %v302 = vpack.c.bf16 %v281, %v280
  %v303 = vpack.c.bf16 %v283, %v282
  %v304 = vpack.c.bf16 %v285, %v284
  %v305 = vpack.c.bf16 %v287, %v286
  %v306 = vpack.c.bf16 %v289, %v288
  %v307 = vpack.c.bf16 %v291, %v290
  %v308 = vpack.c.bf16 %v293, %v292
  %v309 = vpack.c.bf16 %v295, %v294
  %v310 = vpack.c.bf16 %v297, %v296
  %v311 = vpack.c.bf16 %v298, %v298
  %v312 = vld [vmem:[%s3] sm:$0xf]
  %v313 = vld [vmem:[%s3 + $0x4] sm:$0xf]
  %v314 = vld [vmem:[%s3 + $0x8] sm:$0xf]
  %v315 = vld [vmem:[%s3 + $0xc] sm:$0xf]
  %v316 = vld [vmem:[%s3 + $0x10] sm:$0xf]
  %v317 = vld [vmem:[%s3 + $0x14] sm:$0xf]
  %v318 = vld [vmem:[%s3 + $0x18] sm:$0xf]
  %v319 = vld [vmem:[%s3 + $0x1c] sm:$0xf]
  %v320 = vld [vmem:[%s4] sm:$0x1]
  %v322 = vlaneseq
  %v323 = vshrl.u32 %v322, 7
  %v324 = vsub.s32 0, %v323
  %v325 = vrot.slane %v320, %v324
  %v335 = vunpack.c.l.b16 %v312
  %v336 = vunpack.c.l.b16 %v313
  %v337 = vunpack.c.l.b16 %v314
  %v338 = vunpack.c.l.b16 %v315
  %v339 = vunpack.c.l.b16 %v316
  %v340 = vunpack.c.l.b16 %v317
  %v341 = vunpack.c.l.b16 %v318
  %v342 = vunpack.c.l.b16 %v319
  %v343 = vpack.c.b16 %v336, %v335
  %v344 = vpack.c.b16 %v338, %v337
  %v345 = vpack.c.b16 %v340, %v339
  %v346 = vpack.c.b16 %v342, %v341
  %vm351 = vcmask 523264
  %v353 = vsel %vm351, %v299, 0
  %v356 = vsel %vm351, %v300, 0
  %v359 = vsel %vm351, %v301, 0
  %v362 = vsel %vm351, %v302, 0
  %v365 = vsel %vm351, %v303, 0
  %v368 = vsel %vm351, %v304, 0
  %v371 = vsel %vm351, %v305, 0
  %v374 = vsel %vm351, %v306, 0
  %v377 = vsel %vm351, %v307, 0
  %v380 = vsel %vm351, %v308, 0
  %v383 = vsel %vm351, %v309, 0
  %v386 = vsel %vm351, %v310, 0
  %v389 = vsel %vm351, %v311, 0
  %391 = vmatprep.subr.bf16.mxu0 0
  %392 = vmatpush1.bf16.msra.mxu0 %v343
  %393 = vmatprep.subr.bf16.mxu0 0
  %394 = vmatpush1.bf16.msra.mxu0 %v344
  %395 = vmatprep.subr.bf16.mxu0 0
  %396 = vmatpush1.bf16.msra.mxu0 %v345
  %397 = vmatprep.subr.bf16.mxu0 0
  %398 = vmatpush1.bf16.msra.mxu0 %v346
  %399 = vmatprep.subr.bf16.mxu0 0
  %400 = vmatpush1.bf16.msra.mxu0 0
  %401 = vmatprep.subr.bf16.mxu0 0
  %402 = vmatpush1.bf16.msra.mxu0 0
  %403 = vmatprep.subr.bf16.mxu0 0
  %404 = vmatpush1.bf16.msra.mxu0 0
  %405 = vmatprep.subr.bf16.mxu0 0
  %406 = vmatpush1.bf16.msra.mxu0 0
  %407 = vmatprep.subr.bf16.mxu0 0
  %408 = vmatpush1.bf16.msra.mxu0 0
  %409 = vmatprep.subr.bf16.mxu0 0
  %410 = vmatpush1.bf16.msra.mxu0 0
  %411 = vmatprep.subr.bf16.mxu0 0
  %412 = vmatpush1.bf16.msra.mxu0 0
  %413 = vmatprep.subr.bf16.mxu0 0
  %414 = vmatpush1.bf16.msra.mxu0 0
  %415 = vmatprep.subr.bf16.mxu0 0
  %416 = vmatpush1.bf16.msra.mxu0 0
  %417 = vmatprep.subr.bf16.mxu0 0
  %418 = vmatpush1.bf16.msra.mxu0 0
  %419 = vmatprep.subr.bf16.mxu0 0
  %420 = vmatpush1.bf16.msra.mxu0 0
  %421 = vmatprep.subr.bf16.mxu0 0
  %422 = vmatpush1.bf16.msra.mxu0 0
  %423 = vmatprep.mubr.bf16.mxu0 0
  %424 = vmatmul.mubr.bf16.gmra.mrb[0].mxu0 %v353
  %v425 = vpop.f32.mrb[0].mxu0
  %v426 = vadd.f32 %v325, %v425
  %v427 = vpop.f32.mrb[0].mxu0
  %v428 = vpop.f32.mrb[0].mxu0
  %v429 = vadd.f32 %v325, %v428
  %v430 = vpop.f32.mrb[0].mxu0
  %431 = vmatprep.mubr.bf16.mxu0 0
  %432 = vmatmul.mubr.bf16.gmra.mrb[0].mxu0 %v356
  %v433 = vpop.f32.mrb[0].mxu0
  %v434 = vadd.f32 %v325, %v433
  %v435 = vpop.f32.mrb[0].mxu0
  %v436 = vpop.f32.mrb[0].mxu0
  %v437 = vadd.f32 %v325, %v436
  %v438 = vpop.f32.mrb[0].mxu0
  %439 = vmatprep.mubr.bf16.mxu0 0
  %440 = vmatmul.mubr.bf16.gmra.mrb[0].mxu0 %v359
  %v441 = vpop.f32.mrb[0].mxu0
  %v442 = vadd.f32 %v325, %v441
  %v443 = vpop.f32.mrb[0].mxu0
  %v444 = vpop.f32.mrb[0].mxu0
  %v445 = vadd.f32 %v325, %v444
  %v446 = vpop.f32.mrb[0].mxu0
  %447 = vmatprep.mubr.bf16.mxu0 0
  %448 = vmatmul.mubr.bf16.gmra.mrb[0].mxu0 %v362
  %v449 = vpop.f32.mrb[0].mxu0
  %v450 = vadd.f32 %v325, %v449
  %v451 = vpop.f32.mrb[0].mxu0
  %v452 = vpop.f32.mrb[0].mxu0
  %v453 = vadd.f32 %v325, %v452
  %v454 = vpop.f32.mrb[0].mxu0
  %455 = vmatprep.mubr.bf16.mxu0 0
  %456 = vmatmul.mubr.bf16.gmra.mrb[0].mxu0 %v365
  %v457 = vpop.f32.mrb[0].mxu0
  %v458 = vadd.f32 %v325, %v457
  %v459 = vpop.f32.mrb[0].mxu0
  %v460 = vpop.f32.mrb[0].mxu0
  %v461 = vadd.f32 %v325, %v460
  %v462 = vpop.f32.mrb[0].mxu0
  %463 = vmatprep.mubr.bf16.mxu0 0
  %464 = vmatmul.mubr.bf16.gmra.mrb[0].mxu0 %v368
  %v465 = vpop.f32.mrb[0].mxu0
  %v466 = vadd.f32 %v325, %v465
  %v467 = vpop.f32.mrb[0].mxu0
  %v468 = vpop.f32.mrb[0].mxu0
  %v469 = vadd.f32 %v325, %v468
  %v470 = vpop.f32.mrb[0].mxu0
  %471 = vmatprep.mubr.bf16.mxu0 0
  %472 = vmatmul.mubr.bf16.gmra.mrb[0].mxu0 %v371
  %v473 = vpop.f32.mrb[0].mxu0
  %v474 = vadd.f32 %v325, %v473
  %v475 = vpop.f32.mrb[0].mxu0
  %v476 = vpop.f32.mrb[0].mxu0
  %v477 = vadd.f32 %v325, %v476
  %v478 = vpop.f32.mrb[0].mxu0
  %479 = vmatprep.mubr.bf16.mxu0 0
  %480 = vmatmul.mubr.bf16.gmra.mrb[0].mxu0 %v374
  %v481 = vpop.f32.mrb[0].mxu0
  %v482 = vadd.f32 %v325, %v481
  %v483 = vpop.f32.mrb[0].mxu0
  %v484 = vpop.f32.mrb[0].mxu0
  %v485 = vadd.f32 %v325, %v484
  %v486 = vpop.f32.mrb[0].mxu0
  %487 = vmatprep.mubr.bf16.mxu0 0
  %488 = vmatmul.mubr.bf16.gmra.mrb[0].mxu0 %v377
  %v489 = vpop.f32.mrb[0].mxu0
  %v490 = vadd.f32 %v325, %v489
  %v491 = vpop.f32.mrb[0].mxu0
  %v492 = vpop.f32.mrb[0].mxu0
  %v493 = vadd.f32 %v325, %v492
  %v494 = vpop.f32.mrb[0].mxu0
  %495 = vmatprep.mubr.bf16.mxu0 0
  %496 = vmatmul.mubr.bf16.gmra.mrb[0].mxu0 %v380
  %v497 = vpop.f32.mrb[0].mxu0
  %v498 = vadd.f32 %v325, %v497
  %v499 = vpop.f32.mrb[0].mxu0
  %v500 = vpop.f32.mrb[0].mxu0
  %v501 = vadd.f32 %v325, %v500
  %v502 = vpop.f32.mrb[0].mxu0
  %503 = vmatprep.mubr.bf16.mxu0 0
  %504 = vmatmul.mubr.bf16.gmra.mrb[0].mxu0 %v383
  %v505 = vpop.f32.mrb[0].mxu0
  %v506 = vadd.f32 %v325, %v505
  %v507 = vpop.f32.mrb[0].mxu0
  %v508 = vpop.f32.mrb[0].mxu0
  %v509 = vadd.f32 %v325, %v508
  %v510 = vpop.f32.mrb[0].mxu0
  %511 = vmatprep.mubr.bf16.mxu0 0
  %512 = vmatmul.mubr.bf16.gmra.mrb[0].mxu0 %v386
  %v513 = vpop.f32.mrb[0].mxu0
  %v514 = vadd.f32 %v325, %v513
  %v515 = vpop.f32.mrb[0].mxu0
  %v516 = vpop.f32.mrb[0].mxu0
  %v517 = vadd.f32 %v325, %v516
  %v518 = vpop.f32.mrb[0].mxu0
  %519 = vmatprep.mubr.bf16.mxu0 0
  %520 = vmatmul.mubr.bf16.gmra.mrb[0].mxu0 %v389
  %v521 = vpop.f32.mrb[0].mxu0
  %v522 = vadd.f32 %v325, %v521
  %v523 = vpop.f32.mrb[0].mxu0
  %v524 = vpop.f32.mrb[0].mxu0
  %v525 = vpop.f32.mrb[0].mxu0
  %526 = vdwg.mxu0
  %v527 = vmax.f32 %v426, 0.0
  %v528 = vmax.f32 %v429, 0.0
  %v529 = vmax.f32 %v434, 0.0
  %v530 = vmax.f32 %v437, 0.0
  %v531 = vmax.f32 %v442, 0.0
  %v532 = vmax.f32 %v445, 0.0
  %v533 = vmax.f32 %v450, 0.0
  %v534 = vmax.f32 %v453, 0.0
  %v535 = vmax.f32 %v458, 0.0
  %v536 = vmax.f32 %v461, 0.0
  %v537 = vmax.f32 %v466, 0.0
  %v538 = vmax.f32 %v469, 0.0
  %v539 = vmax.f32 %v474, 0.0
  %v540 = vmax.f32 %v477, 0.0
  %v541 = vmax.f32 %v482, 0.0
  %v542 = vmax.f32 %v485, 0.0
  %v543 = vmax.f32 %v490, 0.0
  %v544 = vmax.f32 %v493, 0.0
  %v545 = vmax.f32 %v498, 0.0
  %v546 = vmax.f32 %v501, 0.0
  %v547 = vmax.f32 %v506, 0.0
  %v548 = vmax.f32 %v509, 0.0
  %v549 = vmax.f32 %v514, 0.0
  %v550 = vmax.f32 %v517, 0.0
  %v551 = vmax.f32 %v522, 0.0
  %v552 = vpack.c.bf16 %v528, %v527
  %v553 = vpack.c.bf16 %v530, %v529
  %v554 = vpack.c.bf16 %v532, %v531
  %v555 = vpack.c.bf16 %v534, %v533
  %v556 = vpack.c.bf16 %v536, %v535
  %v557 = vpack.c.bf16 %v538, %v537
  %v558 = vpack.c.bf16 %v540, %v539
  %v559 = vpack.c.bf16 %v542, %v541
  %v560 = vpack.c.bf16 %v544, %v543
  %v561 = vpack.c.bf16 %v546, %v545
  %v562 = vpack.c.bf16 %v548, %v547
  %v563 = vpack.c.bf16 %v550, %v549
  %v564 = vpack.c.bf16 %v551, %v551
  %v565 = vld [vmem:[%s5] sm:$0xf]
  %v566 = vld [vmem:[%s5 + $0x4] sm:$0xf]
  %v567 = vld [vmem:[%s5 + $0x8] sm:$0xf]
  %v568 = vld [vmem:[%s5 + $0xc] sm:$0xf]
  %v569 = vld [vmem:[%s5 + $0x10] sm:$0xf]
  %v570 = vld [vmem:[%s5 + $0x14] sm:$0xf]
  %v571 = vld [vmem:[%s5 + $0x18] sm:$0xf]
  %v572 = vld [vmem:[%s5 + $0x1c] sm:$0xf]
  %v573 = vld [vmem:[%s6] sm:$0x1]
  %v575 = vlaneseq
  %v576 = vshrl.u32 %v575, 7
  %v577 = vsub.s32 0, %v576
  %v578 = vrot.slane %v573, %v577
  %v588 = vunpack.c.l.b16 %v565
  %v589 = vunpack.c.l.b16 %v566
  %v590 = vunpack.c.l.b16 %v567
  %v591 = vunpack.c.l.b16 %v568
  %v592 = vunpack.c.l.b16 %v569
  %v593 = vunpack.c.l.b16 %v570
  %v594 = vunpack.c.l.b16 %v571
  %v595 = vunpack.c.l.b16 %v572
  %v596 = vpack.c.b16 %v589, %v588
  %v597 = vpack.c.b16 %v591, %v590
  %v598 = vpack.c.b16 %v593, %v592
  %v599 = vpack.c.b16 %v595, %v594
  %v605 = vsel %vm351, %v552, 0
  %v608 = vsel %vm351, %v553, 0
  %v611 = vsel %vm351, %v554, 0
  %v614 = vsel %vm351, %v555, 0
  %v617 = vsel %vm351, %v556, 0
  %v620 = vsel %vm351, %v557, 0
  %v623 = vsel %vm351, %v558, 0
  %v626 = vsel %vm351, %v559, 0
  %v629 = vsel %vm351, %v560, 0
  %v632 = vsel %vm351, %v561, 0
  %v635 = vsel %vm351, %v562, 0
  %v638 = vsel %vm351, %v563, 0
  %v641 = vsel %vm351, %v564, 0
  %643 = vmatprep.subr.bf16.mxu0 0
  %644 = vmatpush1.bf16.msra.mxu0 %v596
  %645 = vmatprep.subr.bf16.mxu0 0
  %646 = vmatpush1.bf16.msra.mxu0 %v597
  %647 = vmatprep.subr.bf16.mxu0 0
  %648 = vmatpush1.bf16.msra.mxu0 %v598
  %649 = vmatprep.subr.bf16.mxu0 0
  %650 = vmatpush1.bf16.msra.mxu0 %v599
  %651 = vmatprep.subr.bf16.mxu0 0
  %652 = vmatpush1.bf16.msra.mxu0 0
  %653 = vmatprep.subr.bf16.mxu0 0
  %654 = vmatpush1.bf16.msra.mxu0 0
  %655 = vmatprep.subr.bf16.mxu0 0
  %656 = vmatpush1.bf16.msra.mxu0 0
  %657 = vmatprep.subr.bf16.mxu0 0
  %658 = vmatpush1.bf16.msra.mxu0 0
  %659 = vmatprep.subr.bf16.mxu0 0
  %660 = vmatpush1.bf16.msra.mxu0 0
  %661 = vmatprep.subr.bf16.mxu0 0
  %662 = vmatpush1.bf16.msra.mxu0 0
  %663 = vmatprep.subr.bf16.mxu0 0
  %664 = vmatpush1.bf16.msra.mxu0 0
  %665 = vmatprep.subr.bf16.mxu0 0
  %666 = vmatpush1.bf16.msra.mxu0 0
  %667 = vmatprep.subr.bf16.mxu0 0
  %668 = vmatpush1.bf16.msra.mxu0 0
  %669 = vmatprep.subr.bf16.mxu0 0
  %670 = vmatpush1.bf16.msra.mxu0 0
  %671 = vmatprep.subr.bf16.mxu0 0
  %672 = vmatpush1.bf16.msra.mxu0 0
  %673 = vmatprep.subr.bf16.mxu0 0
  %674 = vmatpush1.bf16.msra.mxu0 0
  %675 = vmatprep.mubr.bf16.mxu0 0
  %676 = vmatmul.mubr.bf16.gmra.mrb[0].mxu0 %v605
  %v677 = vpop.f32.mrb[0].mxu0
  %v678 = vadd.f32 %v578, %v677
  %v679 = vpop.f32.mrb[0].mxu0
  %v680 = vpop.f32.mrb[0].mxu0
  %v681 = vadd.f32 %v578, %v680
  %v682 = vpop.f32.mrb[0].mxu0
  %683 = vmatprep.mubr.bf16.mxu0 0
  %684 = vmatmul.mubr.bf16.gmra.mrb[0].mxu0 %v608
  %v685 = vpop.f32.mrb[0].mxu0
  %v686 = vadd.f32 %v578, %v685
  %v687 = vpop.f32.mrb[0].mxu0
  %v688 = vpop.f32.mrb[0].mxu0
  %v689 = vadd.f32 %v578, %v688
  %v690 = vpop.f32.mrb[0].mxu0
  %691 = vmatprep.mubr.bf16.mxu0 0
  %692 = vmatmul.mubr.bf16.gmra.mrb[0].mxu0 %v611
  %v693 = vpop.f32.mrb[0].mxu0
  %v694 = vadd.f32 %v578, %v693
  %v695 = vpop.f32.mrb[0].mxu0
  %v696 = vpop.f32.mrb[0].mxu0
  %v697 = vadd.f32 %v578, %v696
  %v698 = vpop.f32.mrb[0].mxu0
  %699 = vmatprep.mubr.bf16.mxu0 0
  %700 = vmatmul.mubr.bf16.gmra.mrb[0].mxu0 %v614
  %v701 = vpop.f32.mrb[0].mxu0
  %v702 = vadd.f32 %v578, %v701
  %v703 = vpop.f32.mrb[0].mxu0
  %v704 = vpop.f32.mrb[0].mxu0
  %v705 = vadd.f32 %v578, %v704
  %v706 = vpop.f32.mrb[0].mxu0
  %707 = vmatprep.mubr.bf16.mxu0 0
  %708 = vmatmul.mubr.bf16.gmra.mrb[0].mxu0 %v617
  %v709 = vpop.f32.mrb[0].mxu0
  %v710 = vadd.f32 %v578, %v709
  %v711 = vpop.f32.mrb[0].mxu0
  %v712 = vpop.f32.mrb[0].mxu0
  %v713 = vadd.f32 %v578, %v712
  %v714 = vpop.f32.mrb[0].mxu0
  %715 = vmatprep.mubr.bf16.mxu0 0
  %716 = vmatmul.mubr.bf16.gmra.mrb[0].mxu0 %v620
  %v717 = vpop.f32.mrb[0].mxu0
  %v718 = vadd.f32 %v578, %v717
  %v719 = vpop.f32.mrb[0].mxu0
  %v720 = vpop.f32.mrb[0].mxu0
  %v721 = vadd.f32 %v578, %v720
  %v722 = vpop.f32.mrb[0].mxu0
  %723 = vmatprep.mubr.bf16.mxu0 0
  %724 = vmatmul.mubr.bf16.gmra.mrb[0].mxu0 %v623
  %v725 = vpop.f32.mrb[0].mxu0
  %v726 = vadd.f32 %v578, %v725
  %v727 = vpop.f32.mrb[0].mxu0
  %v728 = vpop.f32.mrb[0].mxu0
  %v729 = vadd.f32 %v578, %v728
  %v730 = vpop.f32.mrb[0].mxu0
  %731 = vmatprep.mubr.bf16.mxu0 0
  %732 = vmatmul.mubr.bf16.gmra.mrb[0].mxu0 %v626
  %v733 = vpop.f32.mrb[0].mxu0
  %v734 = vadd.f32 %v578, %v733
  %v735 = vpop.f32.mrb[0].mxu0
  %v736 = vpop.f32.mrb[0].mxu0
  %v737 = vadd.f32 %v578, %v736
  %v738 = vpop.f32.mrb[0].mxu0
  %739 = vmatprep.mubr.bf16.mxu0 0
  %740 = vmatmul.mubr.bf16.gmra.mrb[0].mxu0 %v629
  %v741 = vpop.f32.mrb[0].mxu0
  %v742 = vadd.f32 %v578, %v741
  %v743 = vpop.f32.mrb[0].mxu0
  %v744 = vpop.f32.mrb[0].mxu0
  %v745 = vadd.f32 %v578, %v744
  %v746 = vpop.f32.mrb[0].mxu0
  %747 = vmatprep.mubr.bf16.mxu0 0
  %748 = vmatmul.mubr.bf16.gmra.mrb[0].mxu0 %v632
  %v749 = vpop.f32.mrb[0].mxu0
  %v750 = vadd.f32 %v578, %v749
  %v751 = vpop.f32.mrb[0].mxu0
  %v752 = vpop.f32.mrb[0].mxu0
  %v753 = vadd.f32 %v578, %v752
  %v754 = vpop.f32.mrb[0].mxu0
  %755 = vmatprep.mubr.bf16.mxu0 0
  %756 = vmatmul.mubr.bf16.gmra.mrb[0].mxu0 %v635
  %v757 = vpop.f32.mrb[0].mxu0
  %v758 = vadd.f32 %v578, %v757
  %v759 = vpop.f32.mrb[0].mxu0
  %v760 = vpop.f32.mrb[0].mxu0
  %v761 = vadd.f32 %v578, %v760
  %v762 = vpop.f32.mrb[0].mxu0
  %763 = vmatprep.mubr.bf16.mxu0 0
  %764 = vmatmul.mubr.bf16.gmra.mrb[0].mxu0 %v638
  %v765 = vpop.f32.mrb[0].mxu0
  %v766 = vadd.f32 %v578, %v765
  %v767 = vpop.f32.mrb[0].mxu0
  %v768 = vpop.f32.mrb[0].mxu0
  %v769 = vadd.f32 %v578, %v768
  %v770 = vpop.f32.mrb[0].mxu0
  %771 = vmatprep.mubr.bf16.mxu0 0
  %772 = vmatmul.mubr.bf16.gmra.mrb[0].mxu0 %v641
  %v773 = vpop.f32.mrb[0].mxu0
  %v774 = vadd.f32 %v578, %v773
  %v775 = vpop.f32.mrb[0].mxu0
  %v776 = vpop.f32.mrb[0].mxu0
  %v777 = vpop.f32.mrb[0].mxu0
  %778 = vdwg.mxu0
  %v779 = vmax.f32 %v678, 0.0
  %v780 = vmax.f32 %v681, 0.0
  %v781 = vmax.f32 %v686, 0.0
  %v782 = vmax.f32 %v689, 0.0
  %v783 = vmax.f32 %v694, 0.0
  %v784 = vmax.f32 %v697, 0.0
  %v785 = vmax.f32 %v702, 0.0
  %v786 = vmax.f32 %v705, 0.0
  %v787 = vmax.f32 %v710, 0.0
  %v788 = vmax.f32 %v713, 0.0
  %v789 = vmax.f32 %v718, 0.0
  %v790 = vmax.f32 %v721, 0.0
  %v791 = vmax.f32 %v726, 0.0
  %v792 = vmax.f32 %v729, 0.0
  %v793 = vmax.f32 %v734, 0.0
  %v794 = vmax.f32 %v737, 0.0
  %v795 = vmax.f32 %v742, 0.0
  %v796 = vmax.f32 %v745, 0.0
  %v797 = vmax.f32 %v750, 0.0
  %v798 = vmax.f32 %v753, 0.0
  %v799 = vmax.f32 %v758, 0.0
  %v800 = vmax.f32 %v761, 0.0
  %v801 = vmax.f32 %v766, 0.0
  %v802 = vmax.f32 %v769, 0.0
  %v803 = vmax.f32 %v774, 0.0
  %v804 = vpack.c.bf16 %v780, %v779
  %v805 = vpack.c.bf16 %v782, %v781
  %v806 = vpack.c.bf16 %v784, %v783
  %v807 = vpack.c.bf16 %v786, %v785
  %v808 = vpack.c.bf16 %v788, %v787
  %v809 = vpack.c.bf16 %v790, %v789
  %v810 = vpack.c.bf16 %v792, %v791
  %v811 = vpack.c.bf16 %v794, %v793
  %v812 = vpack.c.bf16 %v796, %v795
  %v813 = vpack.c.bf16 %v798, %v797
  %v814 = vpack.c.bf16 %v800, %v799
  %v815 = vpack.c.bf16 %v802, %v801
  %v816 = vpack.c.bf16 %v803, %v803
  %v817 = vld [vmem:[%s7] sm:$0xf]
  %v818 = vld [vmem:[%s7 + $0x4] sm:$0xf]
  %v819 = vld [vmem:[%s7 + $0x8] sm:$0xf]
  %v820 = vld [vmem:[%s7 + $0xc] sm:$0xf]
  %v821 = vld [vmem:[%s7 + $0x10] sm:$0xf]
  %v822 = vld [vmem:[%s7 + $0x14] sm:$0xf]
  %v823 = vld [vmem:[%s7 + $0x18] sm:$0xf]
  %v824 = vld [vmem:[%s7 + $0x1c] sm:$0xf]
  %v825 = vld [vmem:[%s8] sm:$0x1]
  %v827 = vlaneseq
  %v828 = vshrl.u32 %v827, 7
  %v829 = vsub.s32 0, %v828
  %v830 = vrot.slane %v825, %v829
  %v840 = vunpack.c.l.b16 %v817
  %v841 = vunpack.c.l.b16 %v818
  %v842 = vunpack.c.l.b16 %v819
  %v843 = vunpack.c.l.b16 %v820
  %v844 = vunpack.c.l.b16 %v821
  %v845 = vunpack.c.l.b16 %v822
  %v846 = vunpack.c.l.b16 %v823
  %v847 = vunpack.c.l.b16 %v824
  %v848 = vpack.c.b16 %v841, %v840
  %v849 = vpack.c.b16 %v843, %v842
  %v850 = vpack.c.b16 %v845, %v844
  %v851 = vpack.c.b16 %v847, %v846
  %v857 = vsel %vm351, %v804, 0
  %v860 = vsel %vm351, %v805, 0
  %v863 = vsel %vm351, %v806, 0
  %v866 = vsel %vm351, %v807, 0
  %v869 = vsel %vm351, %v808, 0
  %v872 = vsel %vm351, %v809, 0
  %v875 = vsel %vm351, %v810, 0
  %v878 = vsel %vm351, %v811, 0
  %v881 = vsel %vm351, %v812, 0
  %v884 = vsel %vm351, %v813, 0
  %v887 = vsel %vm351, %v814, 0
  %v890 = vsel %vm351, %v815, 0
  %v893 = vsel %vm351, %v816, 0
  %895 = vmatprep.subr.bf16.mxu0 0
  %896 = vmatpush1.bf16.msra.mxu0 %v848
  %897 = vmatprep.subr.bf16.mxu0 0
  %898 = vmatpush1.bf16.msra.mxu0 %v849
  %899 = vmatprep.subr.bf16.mxu0 0
  %900 = vmatpush1.bf16.msra.mxu0 %v850
  %901 = vmatprep.subr.bf16.mxu0 0
  %902 = vmatpush1.bf16.msra.mxu0 %v851
  %903 = vmatprep.subr.bf16.mxu0 0
  %904 = vmatpush1.bf16.msra.mxu0 0
  %905 = vmatprep.subr.bf16.mxu0 0
  %906 = vmatpush1.bf16.msra.mxu0 0
  %907 = vmatprep.subr.bf16.mxu0 0
  %908 = vmatpush1.bf16.msra.mxu0 0
  %909 = vmatprep.subr.bf16.mxu0 0
  %910 = vmatpush1.bf16.msra.mxu0 0
  %911 = vmatprep.subr.bf16.mxu0 0
  %912 = vmatpush1.bf16.msra.mxu0 0
  %913 = vmatprep.subr.bf16.mxu0 0
  %914 = vmatpush1.bf16.msra.mxu0 0
  %915 = vmatprep.subr.bf16.mxu0 0
  %916 = vmatpush1.bf16.msra.mxu0 0
  %917 = vmatprep.subr.bf16.mxu0 0
  %918 = vmatpush1.bf16.msra.mxu0 0
  %919 = vmatprep.subr.bf16.mxu0 0
  %920 = vmatpush1.bf16.msra.mxu0 0
  %921 = vmatprep.subr.bf16.mxu0 0
  %922 = vmatpush1.bf16.msra.mxu0 0
  %923 = vmatprep.subr.bf16.mxu0 0
  %924 = vmatpush1.bf16.msra.mxu0 0
  %925 = vmatprep.subr.bf16.mxu0 0
  %926 = vmatpush1.bf16.msra.mxu0 0
  %927 = vmatprep.mubr.bf16.mxu0 0
  %928 = vmatmul.mubr.bf16.gmra.mrb[0].mxu0 %v857
  %v929 = vpop.f32.mrb[0].mxu0
  %v930 = vadd.f32 %v830, %v929
  %v931 = vpop.f32.mrb[0].mxu0
  %v932 = vpop.f32.mrb[0].mxu0
  %v933 = vadd.f32 %v830, %v932
  %v934 = vpop.f32.mrb[0].mxu0
  %935 = vmatprep.mubr.bf16.mxu0 0
  %936 = vmatmul.mubr.bf16.gmra.mrb[0].mxu0 %v860
  %v937 = vpop.f32.mrb[0].mxu0
  %v938 = vadd.f32 %v830, %v937
  %v939 = vpop.f32.mrb[0].mxu0
  %v940 = vpop.f32.mrb[0].mxu0
  %v941 = vadd.f32 %v830, %v940
  %v942 = vpop.f32.mrb[0].mxu0
  %943 = vmatprep.mubr.bf16.mxu0 0
  %944 = vmatmul.mubr.bf16.gmra.mrb[0].mxu0 %v863
  %v945 = vpop.f32.mrb[0].mxu0
  %v946 = vadd.f32 %v830, %v945
  %v947 = vpop.f32.mrb[0].mxu0
  %v948 = vpop.f32.mrb[0].mxu0
  %v949 = vadd.f32 %v830, %v948
  %v950 = vpop.f32.mrb[0].mxu0
  %951 = vmatprep.mubr.bf16.mxu0 0
  %952 = vmatmul.mubr.bf16.gmra.mrb[0].mxu0 %v866
  %v953 = vpop.f32.mrb[0].mxu0
  %v954 = vadd.f32 %v830, %v953
  %v955 = vpop.f32.mrb[0].mxu0
  %v956 = vpop.f32.mrb[0].mxu0
  %v957 = vadd.f32 %v830, %v956
  %v958 = vpop.f32.mrb[0].mxu0
  %959 = vmatprep.mubr.bf16.mxu0 0
  %960 = vmatmul.mubr.bf16.gmra.mrb[0].mxu0 %v869
  %v961 = vpop.f32.mrb[0].mxu0
  %v962 = vadd.f32 %v830, %v961
  %v963 = vpop.f32.mrb[0].mxu0
  %v964 = vpop.f32.mrb[0].mxu0
  %v965 = vadd.f32 %v830, %v964
  %v966 = vpop.f32.mrb[0].mxu0
  %967 = vmatprep.mubr.bf16.mxu0 0
  %968 = vmatmul.mubr.bf16.gmra.mrb[0].mxu0 %v872
  %v969 = vpop.f32.mrb[0].mxu0
  %v970 = vadd.f32 %v830, %v969
  %v971 = vpop.f32.mrb[0].mxu0
  %v972 = vpop.f32.mrb[0].mxu0
  %v973 = vadd.f32 %v830, %v972
  %v974 = vpop.f32.mrb[0].mxu0
  %975 = vmatprep.mubr.bf16.mxu0 0
  %976 = vmatmul.mubr.bf16.gmra.mrb[0].mxu0 %v875
  %v977 = vpop.f32.mrb[0].mxu0
  %v978 = vadd.f32 %v830, %v977
  %v979 = vpop.f32.mrb[0].mxu0
  %v980 = vpop.f32.mrb[0].mxu0
  %v981 = vadd.f32 %v830, %v980
  %v982 = vpop.f32.mrb[0].mxu0
  %983 = vmatprep.mubr.bf16.mxu0 0
  %984 = vmatmul.mubr.bf16.gmra.mrb[0].mxu0 %v878
  %v985 = vpop.f32.mrb[0].mxu0
  %v986 = vadd.f32 %v830, %v985
  %v987 = vpop.f32.mrb[0].mxu0
  %v988 = vpop.f32.mrb[0].mxu0
  %v989 = vadd.f32 %v830, %v988
  %v990 = vpop.f32.mrb[0].mxu0
  %991 = vmatprep.mubr.bf16.mxu0 0
  %992 = vmatmul.mubr.bf16.gmra.mrb[0].mxu0 %v881
  %v993 = vpop.f32.mrb[0].mxu0
  %v994 = vadd.f32 %v830, %v993
  %v995 = vpop.f32.mrb[0].mxu0
  %v996 = vpop.f32.mrb[0].mxu0
  %v997 = vadd.f32 %v830, %v996
  %v998 = vpop.f32.mrb[0].mxu0
  %999 = vmatprep.mubr.bf16.mxu0 0
  %1000 = vmatmul.mubr.bf16.gmra.mrb[0].mxu0 %v884
  %v1001 = vpop.f32.mrb[0].mxu0
  %v1002 = vadd.f32 %v830, %v1001
  %v1003 = vpop.f32.mrb[0].mxu0
  %v1004 = vpop.f32.mrb[0].mxu0
  %v1005 = vadd.f32 %v830, %v1004
  %v1006 = vpop.f32.mrb[0].mxu0
  %1007 = vmatprep.mubr.bf16.mxu0 0
  %1008 = vmatmul.mubr.bf16.gmra.mrb[0].mxu0 %v887
  %v1009 = vpop.f32.mrb[0].mxu0
  %v1010 = vadd.f32 %v830, %v1009
  %v1011 = vpop.f32.mrb[0].mxu0
  %v1012 = vpop.f32.mrb[0].mxu0
  %v1013 = vadd.f32 %v830, %v1012
  %v1014 = vpop.f32.mrb[0].mxu0
  %1015 = vmatprep.mubr.bf16.mxu0 0
  %1016 = vmatmul.mubr.bf16.gmra.mrb[0].mxu0 %v890
  %v1017 = vpop.f32.mrb[0].mxu0
  %v1018 = vadd.f32 %v830, %v1017
  %v1019 = vpop.f32.mrb[0].mxu0
  %v1020 = vpop.f32.mrb[0].mxu0
  %v1021 = vadd.f32 %v830, %v1020
  %v1022 = vpop.f32.mrb[0].mxu0
  %1023 = vmatprep.mubr.bf16.mxu0 0
  %1024 = vmatmul.mubr.bf16.gmra.mrb[0].mxu0 %v893
  %v1025 = vpop.f32.mrb[0].mxu0
  %v1026 = vadd.f32 %v830, %v1025
  %v1027 = vpop.f32.mrb[0].mxu0
  %v1028 = vpop.f32.mrb[0].mxu0
  %v1029 = vpop.f32.mrb[0].mxu0
  %1030 = vdwg.mxu0
  %vm1031 = vcmask 64512
  %v1032 = vsel %vm1031, %v930, -inf
  %1033 = vmax.xlane.f32.xlu0 %v1032
  %v1034 = vpop.xlane.xlu0 %1033
  %v1035 = vsel %vm1031, %v933, -inf
  %1036 = vmax.xlane.f32.xlu0 %v1035
  %v1037 = vpop.xlane.xlu0 %1036
  %v1038 = vsel %vm1031, %v938, -inf
  %1039 = vmax.xlane.f32.xlu0 %v1038
  %v1040 = vpop.xlane.xlu0 %1039
  %v1041 = vsel %vm1031, %v941, -inf
  %1042 = vmax.xlane.f32.xlu0 %v1041
  %v1043 = vpop.xlane.xlu0 %1042
  %v1044 = vsel %vm1031, %v946, -inf
  %1045 = vmax.xlane.f32.xlu0 %v1044
  %v1046 = vpop.xlane.xlu0 %1045
  %v1047 = vsel %vm1031, %v949, -inf
  %1048 = vmax.xlane.f32.xlu0 %v1047
  %v1049 = vpop.xlane.xlu0 %1048
  %v1050 = vsel %vm1031, %v954, -inf
  %1051 = vmax.xlane.f32.xlu0 %v1050
  %v1052 = vpop.xlane.xlu0 %1051
  %v1053 = vsel %vm1031, %v957, -inf
  %1054 = vmax.xlane.f32.xlu0 %v1053
  %v1055 = vpop.xlane.xlu0 %1054
  %v1056 = vsel %vm1031, %v962, -inf
  %1057 = vmax.xlane.f32.xlu0 %v1056
  %v1058 = vpop.xlane.xlu0 %1057
  %v1059 = vsel %vm1031, %v965, -inf
  %1060 = vmax.xlane.f32.xlu0 %v1059
  %v1061 = vpop.xlane.xlu0 %1060
  %v1062 = vsel %vm1031, %v970, -inf
  %1063 = vmax.xlane.f32.xlu0 %v1062
  %v1064 = vpop.xlane.xlu0 %1063
  %v1065 = vsel %vm1031, %v973, -inf
  %1066 = vmax.xlane.f32.xlu0 %v1065
  %v1067 = vpop.xlane.xlu0 %1066
  %v1068 = vsel %vm1031, %v978, -inf
  %1069 = vmax.xlane.f32.xlu0 %v1068
  %v1070 = vpop.xlane.xlu0 %1069
  %v1071 = vsel %vm1031, %v981, -inf
  %1072 = vmax.xlane.f32.xlu0 %v1071
  %v1073 = vpop.xlane.xlu0 %1072
  %v1074 = vsel %vm1031, %v986, -inf
  %1075 = vmax.xlane.f32.xlu0 %v1074
  %v1076 = vpop.xlane.xlu0 %1075
  %v1077 = vsel %vm1031, %v989, -inf
  %1078 = vmax.xlane.f32.xlu0 %v1077
  %v1079 = vpop.xlane.xlu0 %1078
  %v1080 = vsel %vm1031, %v994, -inf
  %1081 = vmax.xlane.f32.xlu0 %v1080
  %v1082 = vpop.xlane.xlu0 %1081
  %v1083 = vsel %vm1031, %v997, -inf
  %1084 = vmax.xlane.f32.xlu0 %v1083
  %v1085 = vpop.xlane.xlu0 %1084
  %v1086 = vsel %vm1031, %v1002, -inf
  %1087 = vmax.xlane.f32.xlu0 %v1086
  %v1088 = vpop.xlane.xlu0 %1087
  %v1089 = vsel %vm1031, %v1005, -inf
  %1090 = vmax.xlane.f32.xlu0 %v1089
  %v1091 = vpop.xlane.xlu0 %1090
  %v1092 = vsel %vm1031, %v1010, -inf
  %1093 = vmax.xlane.f32.xlu0 %v1092
  %v1094 = vpop.xlane.xlu0 %1093
  %v1095 = vsel %vm1031, %v1013, -inf
  %1096 = vmax.xlane.f32.xlu0 %v1095
  %v1097 = vpop.xlane.xlu0 %1096
  %v1098 = vsel %vm1031, %v1018, -inf
  %1099 = vmax.xlane.f32.xlu0 %v1098
  %v1100 = vpop.xlane.xlu0 %1099
  %v1101 = vsel %vm1031, %v1021, -inf
  %1102 = vmax.xlane.f32.xlu0 %v1101
  %v1103 = vpop.xlane.xlu0 %1102
  %v1104 = vsel %vm1031, %v1026, -inf
  %1105 = vmax.xlane.f32.xlu0 %v1104
  %v1106 = vpop.xlane.xlu0 %1105
  %v1107 = vsub.f32 %v930, %v1034
  %v1108 = vsub.f32 %v933, %v1037
  %v1109 = vsub.f32 %v938, %v1040
  %v1110 = vsub.f32 %v941, %v1043
  %v1111 = vsub.f32 %v946, %v1046
  %v1112 = vsub.f32 %v949, %v1049
  %v1113 = vsub.f32 %v954, %v1052
  %v1114 = vsub.f32 %v957, %v1055
  %v1115 = vsub.f32 %v962, %v1058
  %v1116 = vsub.f32 %v965, %v1061
  %v1117 = vsub.f32 %v970, %v1064
  %v1118 = vsub.f32 %v973, %v1067
  %v1119 = vsub.f32 %v978, %v1070
  %v1120 = vsub.f32 %v981, %v1073
  %v1121 = vsub.f32 %v986, %v1076
  %v1122 = vsub.f32 %v989, %v1079
  %v1123 = vsub.f32 %v994, %v1082
  %v1124 = vsub.f32 %v997, %v1085
  %v1125 = vsub.f32 %v1002, %v1088
  %v1126 = vsub.f32 %v1005, %v1091
  %v1127 = vsub.f32 %v1010, %v1094
  %v1128 = vsub.f32 %v1013, %v1097
  %v1129 = vsub.f32 %v1018, %v1100
  %v1130 = vsub.f32 %v1021, %v1103
  %v1131 = vsub.f32 %v1026, %v1106
  %v1132 = vmul.f32 %v1107, 1.442695
  %v1133 = vpow.pop %v1132
  %v1134 = vmul.f32 %v1108, 1.442695
  %v1135 = vpow.pop %v1134
  %v1136 = vmul.f32 %v1109, 1.442695
  %v1137 = vpow.pop %v1136
  %v1138 = vmul.f32 %v1110, 1.442695
  %v1139 = vpow.pop %v1138
  %v1140 = vmul.f32 %v1111, 1.442695
  %v1141 = vpow.pop %v1140
  %v1142 = vmul.f32 %v1112, 1.442695
  %v1143 = vpow.pop %v1142
  %v1144 = vmul.f32 %v1113, 1.442695
  %v1145 = vpow.pop %v1144
  %v1146 = vmul.f32 %v1114, 1.442695
  %v1147 = vpow.pop %v1146
  %v1148 = vmul.f32 %v1115, 1.442695
  %v1149 = vpow.pop %v1148
  %v1150 = vmul.f32 %v1116, 1.442695
  %v1151 = vpow.pop %v1150
  %v1152 = vmul.f32 %v1117, 1.442695
  %v1153 = vpow.pop %v1152
  %v1154 = vmul.f32 %v1118, 1.442695
  %v1155 = vpow.pop %v1154
  %v1156 = vmul.f32 %v1119, 1.442695
  %v1157 = vpow.pop %v1156
  %v1158 = vmul.f32 %v1120, 1.442695
  %v1159 = vpow.pop %v1158
  %v1160 = vmul.f32 %v1121, 1.442695
  %v1161 = vpow.pop %v1160
  %v1162 = vmul.f32 %v1122, 1.442695
  %v1163 = vpow.pop %v1162
  %v1164 = vmul.f32 %v1123, 1.442695
  %v1165 = vpow.pop %v1164
  %v1166 = vmul.f32 %v1124, 1.442695
  %v1167 = vpow.pop %v1166
  %v1168 = vmul.f32 %v1125, 1.442695
  %v1169 = vpow.pop %v1168
  %v1170 = vmul.f32 %v1126, 1.442695
  %v1171 = vpow.pop %v1170
  %v1172 = vmul.f32 %v1127, 1.442695
  %v1173 = vpow.pop %v1172
  %v1174 = vmul.f32 %v1128, 1.442695
  %v1175 = vpow.pop %v1174
  %v1176 = vmul.f32 %v1129, 1.442695
  %v1177 = vpow.pop %v1176
  %v1178 = vmul.f32 %v1130, 1.442695
  %v1179 = vpow.pop %v1178
  %v1180 = vmul.f32 %v1131, 1.442695
  %v1181 = vpow.pop %v1180
  %v1182 = vsel %vm1031, %v1133, 0.0
  %1183 = vadd.xlane.f32.xlu0 %v1182
  %v1184 = vpop.xlane.xlu0 %1183
  %v1185 = vsel %vm1031, %v1135, 0.0
  %1186 = vadd.xlane.f32.xlu0 %v1185
  %v1187 = vpop.xlane.xlu0 %1186
  %v1188 = vsel %vm1031, %v1137, 0.0
  %1189 = vadd.xlane.f32.xlu0 %v1188
  %v1190 = vpop.xlane.xlu0 %1189
  %v1191 = vsel %vm1031, %v1139, 0.0
  %1192 = vadd.xlane.f32.xlu0 %v1191
  %v1193 = vpop.xlane.xlu0 %1192
  %v1194 = vsel %vm1031, %v1141, 0.0
  %1195 = vadd.xlane.f32.xlu0 %v1194
  %v1196 = vpop.xlane.xlu0 %1195
  %v1197 = vsel %vm1031, %v1143, 0.0
  %1198 = vadd.xlane.f32.xlu0 %v1197
  %v1199 = vpop.xlane.xlu0 %1198
  %v1200 = vsel %vm1031, %v1145, 0.0
  %1201 = vadd.xlane.f32.xlu0 %v1200
  %v1202 = vpop.xlane.xlu0 %1201
  %v1203 = vsel %vm1031, %v1147, 0.0
  %1204 = vadd.xlane.f32.xlu0 %v1203
  %v1205 = vpop.xlane.xlu0 %1204
  %v1206 = vsel %vm1031, %v1149, 0.0
  %1207 = vadd.xlane.f32.xlu0 %v1206
  %v1208 = vpop.xlane.xlu0 %1207
  %v1209 = vsel %vm1031, %v1151, 0.0
  %1210 = vadd.xlane.f32.xlu0 %v1209
  %v1211 = vpop.xlane.xlu0 %1210
  %v1212 = vsel %vm1031, %v1153, 0.0
  %1213 = vadd.xlane.f32.xlu0 %v1212
  %v1214 = vpop.xlane.xlu0 %1213
  %v1215 = vsel %vm1031, %v1155, 0.0
  %1216 = vadd.xlane.f32.xlu0 %v1215
  %v1217 = vpop.xlane.xlu0 %1216
  %v1218 = vsel %vm1031, %v1157, 0.0
  %1219 = vadd.xlane.f32.xlu0 %v1218
  %v1220 = vpop.xlane.xlu0 %1219
  %v1221 = vsel %vm1031, %v1159, 0.0
  %1222 = vadd.xlane.f32.xlu0 %v1221
  %v1223 = vpop.xlane.xlu0 %1222
  %v1224 = vsel %vm1031, %v1161, 0.0
  %1225 = vadd.xlane.f32.xlu0 %v1224
  %v1226 = vpop.xlane.xlu0 %1225
  %v1227 = vsel %vm1031, %v1163, 0.0
  %1228 = vadd.xlane.f32.xlu0 %v1227
  %v1229 = vpop.xlane.xlu0 %1228
  %v1230 = vsel %vm1031, %v1165, 0.0
  %1231 = vadd.xlane.f32.xlu0 %v1230
  %v1232 = vpop.xlane.xlu0 %1231
  %v1233 = vsel %vm1031, %v1167, 0.0
  %1234 = vadd.xlane.f32.xlu0 %v1233
  %v1235 = vpop.xlane.xlu0 %1234
  %v1236 = vsel %vm1031, %v1169, 0.0
  %1237 = vadd.xlane.f32.xlu0 %v1236
  %v1238 = vpop.xlane.xlu0 %1237
  %v1239 = vsel %vm1031, %v1171, 0.0
  %1240 = vadd.xlane.f32.xlu0 %v1239
  %v1241 = vpop.xlane.xlu0 %1240
  %v1242 = vsel %vm1031, %v1173, 0.0
  %1243 = vadd.xlane.f32.xlu0 %v1242
  %v1244 = vpop.xlane.xlu0 %1243
  %v1245 = vsel %vm1031, %v1175, 0.0
  %1246 = vadd.xlane.f32.xlu0 %v1245
  %v1247 = vpop.xlane.xlu0 %1246
  %v1248 = vsel %vm1031, %v1177, 0.0
  %1249 = vadd.xlane.f32.xlu0 %v1248
  %v1250 = vpop.xlane.xlu0 %1249
  %v1251 = vsel %vm1031, %v1179, 0.0
  %1252 = vadd.xlane.f32.xlu0 %v1251
  %v1253 = vpop.xlane.xlu0 %1252
  %v1254 = vsel %vm1031, %v1181, 0.0
  %1255 = vadd.xlane.f32.xlu0 %v1254
  %v1256 = vpop.xlane.xlu0 %1255
  %s1257 = sld [smem:[#allocation2]]
  %v1258 = vrcp.pop %v1184
  %v1259 = vrcp.pop %v1187
  %v1260 = vrcp.pop %v1190
  %v1261 = vrcp.pop %v1193
  %v1262 = vrcp.pop %v1196
  %v1263 = vrcp.pop %v1199
  %v1264 = vrcp.pop %v1202
  %v1265 = vrcp.pop %v1205
  %v1266 = vrcp.pop %v1208
  %v1267 = vrcp.pop %v1211
  %v1268 = vrcp.pop %v1214
  %v1269 = vrcp.pop %v1217
  %v1270 = vrcp.pop %v1220
  %v1271 = vrcp.pop %v1223
  %v1272 = vrcp.pop %v1226
  %v1273 = vrcp.pop %v1229
  %v1274 = vrcp.pop %v1232
  %v1275 = vrcp.pop %v1235
  %v1276 = vrcp.pop %v1238
  %v1277 = vrcp.pop %v1241
  %v1278 = vrcp.pop %v1244
  %v1279 = vrcp.pop %v1247
  %v1280 = vrcp.pop %v1250
  %v1281 = vrcp.pop %v1253
  %v1282 = vrcp.pop %v1256
  %v1283 = vstv %s1257
  %v1284 = vmul.f32 %v1283, %v1258
  %v1285 = vmul.f32 %v1283, %v1259
  %v1286 = vmul.f32 %v1283, %v1260
  %v1287 = vmul.f32 %v1283, %v1261
  %v1288 = vmul.f32 %v1283, %v1262
  %v1289 = vmul.f32 %v1283, %v1263
  %v1290 = vmul.f32 %v1283, %v1264
  %v1291 = vmul.f32 %v1283, %v1265
  %v1292 = vmul.f32 %v1283, %v1266
  %v1293 = vmul.f32 %v1283, %v1267
  %v1294 = vmul.f32 %v1283, %v1268
  %v1295 = vmul.f32 %v1283, %v1269
  %v1296 = vmul.f32 %v1283, %v1270
  %v1297 = vmul.f32 %v1283, %v1271
  %v1298 = vmul.f32 %v1283, %v1272
  %v1299 = vmul.f32 %v1283, %v1273
  %v1300 = vmul.f32 %v1283, %v1274
  %v1301 = vmul.f32 %v1283, %v1275
  %v1302 = vmul.f32 %v1283, %v1276
  %v1303 = vmul.f32 %v1283, %v1277
  %v1304 = vmul.f32 %v1283, %v1278
  %v1305 = vmul.f32 %v1283, %v1279
  %v1306 = vmul.f32 %v1283, %v1280
  %v1307 = vmul.f32 %v1283, %v1281
  %v1308 = vmul.f32 %v1283, %v1282
  %v1309 = vmul.f32 %v1133, %v1284
  %v1310 = vmul.f32 %v1135, %v1285
  %v1311 = vmul.f32 %v1137, %v1286
  %v1312 = vmul.f32 %v1139, %v1287
  %v1313 = vmul.f32 %v1141, %v1288
  %v1314 = vmul.f32 %v1143, %v1289
  %v1315 = vmul.f32 %v1145, %v1290
  %v1316 = vmul.f32 %v1147, %v1291
  %v1317 = vmul.f32 %v1149, %v1292
  %v1318 = vmul.f32 %v1151, %v1293
  %v1319 = vmul.f32 %v1153, %v1294
  %v1320 = vmul.f32 %v1155, %v1295
  %v1321 = vmul.f32 %v1157, %v1296
  %v1322 = vmul.f32 %v1159, %v1297
  %v1323 = vmul.f32 %v1161, %v1298
  %v1324 = vmul.f32 %v1163, %v1299
  %v1325 = vmul.f32 %v1165, %v1300
  %v1326 = vmul.f32 %v1167, %v1301
  %v1327 = vmul.f32 %v1169, %v1302
  %v1328 = vmul.f32 %v1171, %v1303
  %v1329 = vmul.f32 %v1173, %v1304
  %v1330 = vmul.f32 %v1175, %v1305
  %v1331 = vmul.f32 %v1177, %v1306
  %v1332 = vmul.f32 %v1179, %v1307
  %v1333 = vmul.f32 %v1181, %v1308
  %1334 = vst.msk [vmem:[%s10] sm:$0xff] %vm1031, %v1309
  %1335 = vst.msk [vmem:[%s10 + $0x8] sm:$0xff] %vm1031, %v1310
  %1336 = vst.msk [vmem:[%s10 + $0x10] sm:$0xff] %vm1031, %v1311
  %1337 = vst.msk [vmem:[%s10 + $0x18] sm:$0xff] %vm1031, %v1312
  %1338 = vst.msk [vmem:[%s10 + $0x20] sm:$0xff] %vm1031, %v1313
  %1339 = vst.msk [vmem:[%s10 + $0x28] sm:$0xff] %vm1031, %v1314
  %1340 = vst.msk [vmem:[%s10 + $0x30] sm:$0xff] %vm1031, %v1315
  %1341 = vst.msk [vmem:[%s10 + $0x38] sm:$0xff] %vm1031, %v1316
  %1342 = vst.msk [vmem:[%s10 + $0x40] sm:$0xff] %vm1031, %v1317
  %1343 = vst.msk [vmem:[%s10 + $0x48] sm:$0xff] %vm1031, %v1318
  %1344 = vst.msk [vmem:[%s10 + $0x50] sm:$0xff] %vm1031, %v1319
  %1345 = vst.msk [vmem:[%s10 + $0x58] sm:$0xff] %vm1031, %v1320
  %1346 = vst.msk [vmem:[%s10 + $0x60] sm:$0xff] %vm1031, %v1321
  %1347 = vst.msk [vmem:[%s10 + $0x68] sm:$0xff] %vm1031, %v1322
  %1348 = vst.msk [vmem:[%s10 + $0x70] sm:$0xff] %vm1031, %v1323
  %1349 = vst.msk [vmem:[%s10 + $0x78] sm:$0xff] %vm1031, %v1324
  %1350 = vst.msk [vmem:[%s10 + $0x80] sm:$0xff] %vm1031, %v1325
  %1351 = vst.msk [vmem:[%s10 + $0x88] sm:$0xff] %vm1031, %v1326
  %1352 = vst.msk [vmem:[%s10 + $0x90] sm:$0xff] %vm1031, %v1327
  %1353 = vst.msk [vmem:[%s10 + $0x98] sm:$0xff] %vm1031, %v1328
  %1354 = vst.msk [vmem:[%s10 + $0xa0] sm:$0xff] %vm1031, %v1329
  %1355 = vst.msk [vmem:[%s10 + $0xa8] sm:$0xff] %vm1031, %v1330
  %1356 = vst.msk [vmem:[%s10 + $0xb0] sm:$0xff] %vm1031, %v1331
  %1357 = vst.msk [vmem:[%s10 + $0xb8] sm:$0xff] %vm1031, %v1332
  %1358 = vst.msk [vmem:[%s10 + $0xc0] sm:$0xff] %vm1031, %v1333
  // Predicated region
  $region42: #{tpu_custom_call.1} parent=0 // pred_check
    _
  $region43: #{tpu_custom_call.1} parent=0 // pred_check_branch
    %1360 = sbr.rel (0) target = $region45
  $region44: #{tpu_custom_call.1} parent=0 // pred_region
    _
  $region45: #{tpu_custom_call.1} parent=0 // pred_fallthru
    _
  // Predicated region
  $region46: #{tpu_custom_call.1} parent=0 // pred_check
    _
  $region47: #{tpu_custom_call.1} parent=0 // pred_check_branch
    %1362 = sbr.rel (0) target = $region49
  $region48: #{tpu_custom_call.1} parent=0 // pred_region
    _
  $region49: #{tpu_custom_call.1} parent=0 // pred_fallthru
    _

</llo_original>
